<compile_context>
chip_gen: v7x
topology: tpu7x:2x2x1
jax: 0.10.0
libtpu: 0.0.40
codegen_flags: <defaults>
</compile_context>

<pallas_src>
import functools
import math

import jax
import jax.numpy as jnp
from jax import lax
from jax.experimental import pallas as pl
from jax.experimental.pallas import tpu as pltpu

MIB = 1024 * 1024


def _round_up(x, m):
    return ((x + m - 1) // m) * m


def _cdiv(a, b):
    return -(-a // b)


def _vmem_capacity_bytes():
    """Best-effort physical VMEM query; conservative 64 MiB if unavailable."""
    try:
        info = pltpu.get_tpu_info()
        cap = getattr(info, "vmem_capacity_bytes", None)
        if cap:
            return int(cap)
    except Exception:
        pass
    return 64 * MIB


# ---------------------------------------------------------------------------
# Kernel
# ---------------------------------------------------------------------------
def mlm_head_kernel(x_ref, w1_ref, b1_ref, gamma_ref, beta_ref,
                    emb_ref, dbias_ref, o_ref, h_scratch, *, tv, emb_resident):
    j = pl.program_id(1)

    # Transform (dense + gelu + LayerNorm): once per row tile, cached in VMEM
    # scratch and reused for every vocab tile along the "arbitrary" j axis.
    @pl.when(j == 0)
    def _():
        h = jnp.dot(x_ref[...], w1_ref[...],
                    preferred_element_type=jnp.float32)
        h = h + b1_ref[...]
        # erf-based gelu (matches torch.erf formulation), f32 on VPU/EUP.
        h = h * 0.5 * (1.0 + lax.erf(h * (1.0 / math.sqrt(2.0))))
        # LayerNorm, eps=1e-12, biased variance; rsqrt goes to the EUP.
        mu = jnp.mean(h, axis=-1, keepdims=True)
        var = jnp.mean((h - mu) ** 2, axis=-1, keepdims=True)
        h = (h - mu) * lax.rsqrt(var + 1e-12)
        h = h * gamma_ref[...] + beta_ref[...]
        h_scratch[...] = h.astype(h_scratch.dtype)

    # Decoder vocab tile: h @ emb^T[:, j*tv:(j+1)*tv] + bias tile.
    if emb_resident:
        off = pl.multiple_of(j * tv, 128)
        emb_tile = emb_ref[:, pl.ds(off, tv)]
    else:
        emb_tile = emb_ref[...]
    scores = jnp.dot(h_scratch[...], emb_tile,
                     preferred_element_type=jnp.float32)
    o_ref[...] = (scores + dbias_ref[...]).astype(o_ref.dtype)


# ---------------------------------------------------------------------------
# pallas_call builder
# ---------------------------------------------------------------------------
def _pallas_mlm_call(x2d, prep, *, tm, out_dtype, emb_resident,
                     single_buffer_consts, vmem_limit):
    M_pad, H = x2d.shape
    tv = prep["tv"]
    V_pad = prep["emb_t"].shape[1]
    grid = (M_pad // tm, V_pad // tv)
    cdt = prep["compute_dtype"]

    def const_spec(shape):
        # Grid-invariant operand: single-buffer it to reclaim VMEM (v7x).
        if single_buffer_consts:
            return pl.BlockSpec(shape, lambda i, j: (0, 0),
                                pipeline_mode=pl.Buffered(1))
        return pl.BlockSpec(shape, lambda i, j: (0, 0))

    if emb_resident:
        # Whole emb^T resident in VMEM (single buffer); kernel slices by j.
        emb_spec = const_spec((H, V_pad))
    else:
        # Stream one (H, tv) vocab slab per grid step.
        emb_spec = pl.BlockSpec((H, tv), lambda i, j: (0, j))

    kernel = functools.partial(mlm_head_kernel, tv=tv,
                               emb_resident=emb_resident)

    return pl.pallas_call(
        kernel,
        out_shape=jax.ShapeDtypeStruct((M_pad, V_pad), out_dtype),
        grid_spec=pltpu.PrefetchScalarGridSpec(
            num_scalar_prefetch=0,
            grid=grid,
            in_specs=[
                pl.BlockSpec((tm, H), lambda i, j: (i, 0)),   # x row tile
                const_spec((H, H)),                           # dense weight^T
                const_spec((1, H)),                           # dense bias
                const_spec((1, H)),                           # LN gamma
                const_spec((1, H)),                           # LN beta
                emb_spec,                                      # emb^T
                pl.BlockSpec((1, tv), lambda i, j: (0, j)),   # decoder bias
            ],
            out_specs=pl.BlockSpec((tm, tv), lambda i, j: (i, j)),
            scratch_shapes=[pltpu.VMEM((tm, H), cdt)],
        ),
        compiler_params=pltpu.CompilerParams(
            dimension_semantics=("parallel", "arbitrary"),
            vmem_limit_bytes=int(vmem_limit),
        ),
    )(x2d, prep["w1_t"], prep["b1"], prep["gamma"], prep["beta"],
      prep["emb_t"], prep["dbias"])


# ---------------------------------------------------------------------------
# One-time parameter preparation (hoisted off the hot path)
# ---------------------------------------------------------------------------
def prepare_mlm_head_params(params, *, tv=2048, compute_dtype=jnp.bfloat16):
    """Transpose / cast / pad the weights once; reuse on every forward call."""
    w = jnp.asarray(params["w_dense"], jnp.float32)      # [H, H] (out, in)
    emb = jnp.asarray(params["emb"], jnp.float32)        # [V, H]
    H = w.shape[0]
    V = emb.shape[0]

    tv = min(tv, _round_up(V, 128))                      # lane-aligned tile
    V_pad = _round_up(V, tv)

    w1_t = w.T.astype(compute_dtype)                     # [H, H]
    emb_t = emb.T.astype(compute_dtype)                  # [H, V]
    dbias = jnp.asarray(params["dec_bias"], jnp.float32).reshape(1, -1)
    if V_pad != V:
        emb_t = jnp.pad(emb_t, ((0, 0), (0, V_pad - V)))
        dbias = jnp.pad(dbias, ((0, 0), (0, V_pad - V)))

    return {
        "w1_t": w1_t,
        "b1": jnp.asarray(params["b_dense"], jnp.float32).reshape(1, -1),
        "gamma": jnp.asarray(params["ln_gamma"], jnp.float32).reshape(1, -1),
        "beta": jnp.asarray(params["ln_beta"], jnp.float32).reshape(1, -1),
        "emb_t": emb_t,
        "dbias": dbias,
        "tv": int(tv),
        "H": int(H),
        "V": int(V),
        "compute_dtype": compute_dtype,
    }


# ---------------------------------------------------------------------------
# Forward wrapper
# ---------------------------------------------------------------------------
def bert_only_mlm_head(sequence_output, prepared, *, tm=512,
                       out_dtype=jnp.bfloat16, emb_resident=None,
                       trim_output=True):
    """sequence_output: [B, S, H] -> prediction scores [B, S, V]."""
    B, S, H = sequence_output.shape
    assert H == prepared["H"], "hidden size mismatch with prepared params"
    V = prepared["V"]
    V_pad = prepared["emb_t"].shape[1]
    tv = prepared["tv"]
    cdt = prepared["compute_dtype"]
    M = B * S

    # Row tiling: big tiles for arithmetic intensity, multiple of 16 for bf16
    # sublane packing, and >=2 tiles when M allows so both v7x cores get work.
    n_row_tiles = max(1, _cdiv(M, tm))
    if n_row_tiles == 1 and M >= 256:
        n_row_tiles = 2
    tm = _round_up(_cdiv(M, n_row_tiles), 16)
    M_pad = n_row_tiles * tm

    x2d = sequence_output.reshape(M, H)
    if M_pad != M:
        # Zero padding keeps LayerNorm finite on pad rows (var=0, mu=0).
        x2d = jnp.pad(x2d, ((0, M_pad - M), (0, 0)))
    x2d = x2d.astype(cdt)

    cdt_bytes = jnp.dtype(cdt).itemsize
    out_bytes = jnp.dtype(out_dtype).itemsize
    cap = _vmem_capacity_bytes()

    # VMEM working-set estimate with emb^T fully resident (single buffer).
    resident_need = (H * V_pad * cdt_bytes             # resident emb^T
                     + 2 * tm * H * cdt_bytes          # x tiles (double buf)
                     + H * H * cdt_bytes               # w1^T (single buf)
                     + 2 * tm * tv * out_bytes         # out tiles (double buf)
                     + 2 * tv * 4 + 3 * H * 4          # dbias / LN vectors
                     + tm * H * cdt_bytes)             # h scratch
    streamed_need = (resident_need - H * V_pad * cdt_bytes
                     + 2 * H * tv * cdt_bytes)

    if emb_resident is None:
        # Resident emb only if it comfortably fits (v5e/v6e 128 MiB; v7x 64 MiB
        # cannot hold emb^T + working tiles, so it streams).
        emb_resident = resident_need <= int(0.80 * cap)

    if emb_resident:
        vmem_limit = min(cap - 16 * MIB, resident_need + 16 * MIB)
    else:
        vmem_limit = min(cap - 8 * MIB, max(48 * MIB, streamed_need + 16 * MIB))
    vmem_limit = max(int(vmem_limit), 32 * MIB)

    try:
        out = _pallas_mlm_call(x2d, prepared, tm=tm, out_dtype=out_dtype,
                               emb_resident=emb_resident,
                               single_buffer_consts=True,
                               vmem_limit=vmem_limit)
    except Exception:
        # Conservative fallback: streamed emb, default double buffering
        # (identical structure to the previously validated kernel).
        out = _pallas_mlm_call(x2d, prepared, tm=tm, out_dtype=out_dtype,
                               emb_resident=False,
                               single_buffer_consts=False,
                               vmem_limit=min(cap - 8 * MIB, 48 * MIB))

    if not trim_output:
        # Avoid the extra HBM pass of the trimming slice: caller masks/ignores
        # the pad columns/rows ([M_pad, V_pad] logits).
        return out
    return out[:M, :V].reshape(B, S, V)


# ---------------------------------------------------------------------------
# Parameters / reference / test
# ---------------------------------------------------------------------------
def init_params(key, hidden_size, vocab_size):
    k1, k2, k3, k4, k5, k6 = jax.random.split(key, 6)
    return {
        # nn.Linear(H, H): weight [out, in], bias [H]
        "w_dense": jax.random.normal(k1, (hidden_size, hidden_size),
                                     jnp.float32) * 0.02,
        "b_dense": jax.random.normal(k3, (hidden_size,), jnp.float32) * 0.02,
        # BertLayerNorm params (randomized here to make the test meaningful)
        "ln_gamma": 1.0 + jax.random.normal(k4, (hidden_size,),
                                            jnp.float32) * 0.1,
        "ln_beta": jax.random.normal(k5, (hidden_size,), jnp.float32) * 0.1,
        # tied embedding weights [V, H]; decoder bias [V]
        "emb": jax.random.normal(k2, (vocab_size, hidden_size),
                                 jnp.float32) * 0.02,
        "dec_bias": jax.random.normal(k6, (vocab_size,), jnp.float32) * 0.02,
    }


def _reference(x, p, compute_dtype=jnp.bfloat16):
    # Pure-JAX reference mirroring the kernel's mixed precision
    # (bf16 matmul operands, f32 accumulation, f32 gelu/LayerNorm epilogue).
    B, S, H = x.shape
    x2 = x.reshape(-1, H).astype(compute_dtype)
    w1_t = jnp.asarray(p["w_dense"], jnp.float32).T.astype(compute_dtype)
    h = jnp.dot(x2, w1_t, preferred_element_type=jnp.float32) + p["b_dense"]
    h = h * 0.5 * (1.0 + lax.erf(h * (1.0 / math.sqrt(2.0))))
    mu = jnp.mean(h, axis=-1, keepdims=True)
    var = jnp.mean((h - mu) ** 2, axis=-1, keepdims=True)
    h = (h - mu) * lax.rsqrt(var + 1e-12)
    h = h * p["ln_gamma"] + p["ln_beta"]
    h = h.astype(compute_dtype)
    emb_t = jnp.asarray(p["emb"], jnp.float32).T.astype(compute_dtype)
    s = jnp.dot(h, emb_t, preferred_element_type=jnp.float32) + p["dec_bias"]
    return s.reshape(B, S, -1)


if __name__ == "__main__":
    B, S, H, V = 2, 8, 32, 128
    key = jax.random.PRNGKey(0)
    kx, kp = jax.random.split(key)
    sequence_output = jax.random.normal(kx, (B, S, H), jnp.float32)
    params = init_params(kp, H, V)

    prepared = prepare_mlm_head_params(params)
    ref = _reference(sequence_output, params)

    # 1) f32 logits, auto path (resident emb if VMEM allows).
    s32 = jax.block_until_ready(
        bert_only_mlm_head(sequence_output, prepared, out_dtype=jnp.float32))
    assert s32.shape == (B, S, V)
    assert jnp.allclose(s32, ref, atol=2e-3, rtol=2e-3), (
        float(jnp.max(jnp.abs(s32 - ref))))

    # 2) Default bf16 logits (halved output HBM traffic).
    sbf = jax.block_until_ready(bert_only_mlm_head(sequence_output, prepared))
    assert sbf.dtype == jnp.bfloat16
    assert jnp.allclose(sbf.astype(jnp.float32), ref, atol=1e-2, rtol=1e-2), (
        float(jnp.max(jnp.abs(sbf.astype(jnp.float32) - ref))))

    # 3) Forced streamed-emb dataflow (the v7x path).
    sst = jax.block_until_ready(
        bert_only_mlm_head(sequence_output, prepared, out_dtype=jnp.float32,
                           emb_resident=False))
    assert jnp.allclose(sst, ref, atol=2e-3, rtol=2e-3), (
        float(jnp.max(jnp.abs(sst - ref))))

    print("KERNEL_OK")
</pallas_src>

<mosaic_0001>
module attributes {stable_mosaic.version = 11 : i64} {
  func.func @mlm_head_kernel(%arg0: i32, %arg1: i32, %arg2: memref<16x32xbf16, #tpu.memory_space<vmem>>, %arg3: memref<32x32xbf16, #tpu.memory_space<vmem>>, %arg4: memref<1x32xf32, #tpu.memory_space<vmem>>, %arg5: memref<1x32xf32, #tpu.memory_space<vmem>>, %arg6: memref<1x32xf32, #tpu.memory_space<vmem>>, %arg7: memref<32x128xbf16, #tpu.memory_space<vmem>>, %arg8: memref<1x128xf32, #tpu.memory_space<vmem>>, %arg9: memref<16x128xf32, #tpu.memory_space<vmem>>, %arg10: memref<16x32xbf16, #tpu.memory_space<vmem>>) attributes {dimension_semantics = [#tpu.dimension_semantics<parallel>, #tpu.dimension_semantics<arbitrary>], iteration_bounds = array<i64: 1, 1>, scalar_prefetch = 0 : i64, scratch_operands = 1 : i64, tpu.core_type = #tpu.core_type<tc>, window_params = [{transform_indices = @transform_0, window_bounds = array<i64: 16, 32>}, {pipeline_mode = #tpu.pipeline_mode<synchronous>, transform_indices = @transform_1, window_bounds = array<i64: 32, 32>}, {pipeline_mode = #tpu.pipeline_mode<synchronous>, transform_indices = @transform_2, window_bounds = array<i64: 1, 32>}, {pipeline_mode = #tpu.pipeline_mode<synchronous>, transform_indices = @transform_3, window_bounds = array<i64: 1, 32>}, {pipeline_mode = #tpu.pipeline_mode<synchronous>, transform_indices = @transform_4, window_bounds = array<i64: 1, 32>}, {pipeline_mode = #tpu.pipeline_mode<synchronous>, transform_indices = @transform_5, window_bounds = array<i64: 32, 128>}, {transform_indices = @transform_6, window_bounds = array<i64: 1, 128>}, {transform_indices = @transform_7, window_bounds = array<i64: 16, 128>}]} {
    %c0_i32 = arith.constant 0 : i32
    %0 = arith.cmpi eq, %arg1, %c0_i32 : i32
    %1 = arith.extui %0 : i1 to i32
    %c0_i32_0 = arith.constant 0 : i32
    %2 = arith.cmpi ne, %1, %c0_i32_0 : i32
    scf.if %2 {
      %c0_7 = arith.constant 0 : index
      %c0_8 = arith.constant 0 : index
      %13 = vector.load %arg2[%c0_7, %c0_8] : memref<16x32xbf16, #tpu.memory_space<vmem>>, vector<16x32xbf16>
      %c0_9 = arith.constant 0 : index
      %c0_10 = arith.constant 0 : index
      %14 = vector.load %arg3[%c0_9, %c0_10] : memref<32x32xbf16, #tpu.memory_space<vmem>>, vector<32x32xbf16>
      %cst_11 = arith.constant dense<0.000000e+00> : vector<16x32xf32>
      %15 = tpu.matmul %13, %14, %cst_11 {dimension_numbers = #tpu.dot_dimension_numbers<[1], [0], [0], [1], [0, 0, 1, 1], [], []>} : vector<16x32xbf16>, vector<32x32xbf16>, vector<16x32xf32> -> vector<16x32xf32>
      %c0_12 = arith.constant 0 : index
      %c0_13 = arith.constant 0 : index
      %16 = vector.load %arg4[%c0_12, %c0_13] : memref<1x32xf32, #tpu.memory_space<vmem>>, vector<1x32xf32>
      %17 = vector.broadcast %16 : vector<1x32xf32> to vector<16x32xf32>
      %18 = arith.addf %15, %17 : vector<16x32xf32>
      %cst_14 = arith.constant 5.000000e-01 : f32
      %19 = vector.broadcast %cst_14 : f32 to vector<16x32xf32>
      %20 = arith.mulf %18, %19 : vector<16x32xf32>
      %cst_15 = arith.constant 0.707106769 : f32
      %21 = vector.broadcast %cst_15 : f32 to vector<16x32xf32>
      %22 = arith.mulf %18, %21 : vector<16x32xf32>
      %23 = math.erf %22 : vector<16x32xf32>
      %cst_16 = arith.constant 1.000000e+00 : f32
      %24 = vector.broadcast %cst_16 : f32 to vector<16x32xf32>
      %25 = arith.addf %24, %23 : vector<16x32xf32>
      %26 = arith.mulf %20, %25 : vector<16x32xf32>
      %cst_17 = arith.constant dense<0.000000e+00> : vector<16xf32>
      %27 = vector.multi_reduction <add>, %26, %cst_17 [1] : vector<16x32xf32> to vector<16xf32>
      %28 = vector.shape_cast %27 : vector<16xf32> to vector<16x1xf32>
      %cst_18 = arith.constant 3.200000e+01 : f32
      %29 = vector.broadcast %cst_18 : f32 to vector<16x1xf32>
      %30 = arith.divf %28, %29 : vector<16x1xf32>
      %31 = vector.broadcast %30 : vector<16x1xf32> to vector<16x32xf32>
      %32 = arith.subf %26, %31 : vector<16x32xf32>
      %33 = arith.mulf %32, %32 : vector<16x32xf32>
      %cst_19 = arith.constant dense<0.000000e+00> : vector<16xf32>
      %34 = vector.multi_reduction <add>, %33, %cst_19 [1] : vector<16x32xf32> to vector<16xf32>
      %35 = vector.shape_cast %34 : vector<16xf32> to vector<16x1xf32>
      %cst_20 = arith.constant 3.200000e+01 : f32
      %36 = vector.broadcast %cst_20 : f32 to vector<16x1xf32>
      %37 = arith.divf %35, %36 : vector<16x1xf32>
      %38 = vector.broadcast %30 : vector<16x1xf32> to vector<16x32xf32>
      %39 = arith.subf %26, %38 : vector<16x32xf32>
      %cst_21 = arith.constant 9.99999996E-13 : f32
      %40 = vector.broadcast %cst_21 : f32 to vector<16x1xf32>
      %41 = arith.addf %37, %40 : vector<16x1xf32>
      %42 = math.rsqrt %41 : vector<16x1xf32>
      %43 = vector.broadcast %42 : vector<16x1xf32> to vector<16x32xf32>
      %44 = arith.mulf %39, %43 : vector<16x32xf32>
      %c0_22 = arith.constant 0 : index
      %c0_23 = arith.constant 0 : index
      %45 = vector.load %arg5[%c0_22, %c0_23] : memref<1x32xf32, #tpu.memory_space<vmem>>, vector<1x32xf32>
      %46 = vector.broadcast %45 : vector<1x32xf32> to vector<16x32xf32>
      %47 = arith.mulf %44, %46 : vector<16x32xf32>
      %c0_24 = arith.constant 0 : index
      %c0_25 = arith.constant 0 : index
      %48 = vector.load %arg6[%c0_24, %c0_25] : memref<1x32xf32, #tpu.memory_space<vmem>>, vector<1x32xf32>
      %49 = vector.broadcast %48 : vector<1x32xf32> to vector<16x32xf32>
      %50 = arith.addf %47, %49 : vector<16x32xf32>
      %51 = arith.truncf %50 : vector<16x32xf32> to vector<16x32xbf16>
      %c0_26 = arith.constant 0 : index
      %c0_27 = arith.constant 0 : index
      %52 = vector.load %arg10[%c0_26, %c0_27] : memref<16x32xbf16, #tpu.memory_space<vmem>>, vector<16x32xbf16>
      tpu.vector_store %arg10[%c0_26, %c0_27], %51 {strides = array<i32>} : memref<16x32xbf16, #tpu.memory_space<vmem>>, vector<16x32xbf16>,
    } else {
    }
    %c128_i32 = arith.constant 128 : i32
    %3 = arith.muli %arg1, %c128_i32 : i32
    %4 = tpu.assume_multiple %3, 128 : i32
    %c0 = arith.constant 0 : index
    %5 = arith.index_cast %4 : i32 to index
    %6 = vector.load %arg7[%c0, %5] : memref<32x128xbf16, #tpu.memory_space<vmem>>, vector<32x128xbf16>
    %c0_1 = arith.constant 0 : index
    %c0_2 = arith.constant 0 : index
    %7 = vector.load %arg10[%c0_1, %c0_2] : memref<16x32xbf16, #tpu.memory_space<vmem>>, vector<16x32xbf16>
    %cst = arith.constant dense<0.000000e+00> : vector<16x128xf32>
    %8 = tpu.matmul %7, %6, %cst {dimension_numbers = #tpu.dot_dimension_numbers<[1], [0], [0], [1], [0, 0, 1, 1], [], []>} : vector<16x32xbf16>, vector<32x128xbf16>, vector<16x128xf32> -> vector<16x128xf32>
    %c0_3 = arith.constant 0 : index
    %c0_4 = arith.constant 0 : index
    %9 = vector.load %arg8[%c0_3, %c0_4] : memref<1x128xf32, #tpu.memory_space<vmem>>, vector<1x128xf32>
    %10 = vector.broadcast %9 : vector<1x128xf32> to vector<16x128xf32>
    %11 = arith.addf %8, %10 : vector<16x128xf32>
    %c0_5 = arith.constant 0 : index
    %c0_6 = arith.constant 0 : index
    %12 = vector.load %arg9[%c0_5, %c0_6] : memref<16x128xf32, #tpu.memory_space<vmem>>, vector<16x128xf32>
    tpu.vector_store %arg9[%c0_5, %c0_6], %11 {strides = array<i32>} : memref<16x128xf32, #tpu.memory_space<vmem>>, vector<16x128xf32>,
    return
  }
  func.func @transform_0(%arg0: i32, %arg1: i32) -> (i32, i32) {
    %c0_i32 = arith.constant 0 : i32
    %c0_i32_0 = arith.constant 0 : i32
    return %arg0, %c0_i32 : i32, i32
  }
  func.func @transform_1(%arg0: i32, %arg1: i32) -> (i32, i32) {
    %c0_i32 = arith.constant 0 : i32
    %c0_i32_0 = arith.constant 0 : i32
    %c0_i32_1 = arith.constant 0 : i32
    return %c0_i32, %c0_i32_0 : i32, i32
  }
  func.func @transform_2(%arg0: i32, %arg1: i32) -> (i32, i32) {
    %c0_i32 = arith.constant 0 : i32
    %c0_i32_0 = arith.constant 0 : i32
    %c0_i32_1 = arith.constant 0 : i32
    return %c0_i32, %c0_i32_0 : i32, i32
  }
  func.func @transform_3(%arg0: i32, %arg1: i32) -> (i32, i32) {
    %c0_i32 = arith.constant 0 : i32
    %c0_i32_0 = arith.constant 0 : i32
    %c0_i32_1 = arith.constant 0 : i32
    return %c0_i32, %c0_i32_0 : i32, i32
  }
  func.func @transform_4(%arg0: i32, %arg1: i32) -> (i32, i32) {
    %c0_i32 = arith.constant 0 : i32
    %c0_i32_0 = arith.constant 0 : i32
    %c0_i32_1 = arith.constant 0 : i32
    return %c0_i32, %c0_i32_0 : i32, i32
  }
  func.func @transform_5(%arg0: i32, %arg1: i32) -> (i32, i32) {
    %c0_i32 = arith.constant 0 : i32
    %c0_i32_0 = arith.constant 0 : i32
    %c0_i32_1 = arith.constant 0 : i32
    return %c0_i32, %c0_i32_0 : i32, i32
  }
  func.func @transform_6(%arg0: i32, %arg1: i32) -> (i32, i32) {
    %c0_i32 = arith.constant 0 : i32
    %c0_i32_0 = arith.constant 0 : i32
    return %c0_i32, %arg1 : i32, i32
  }
  func.func @transform_7(%arg0: i32, %arg1: i32) -> (i32, i32) {
    %c0_i32 = arith.constant 0 : i32
    return %arg0, %arg1 : i32, i32
  }
}

module attributes {stable_mosaic.version = 11 : i64} {
  func.func @mlm_head_kernel(%arg0: i32, %arg1: i32, %arg2: memref<16x32xbf16, #tpu.memory_space<vmem>>, %arg3: memref<32x32xbf16, #tpu.memory_space<vmem>>, %arg4: memref<1x32xf32, #tpu.memory_space<vmem>>, %arg5: memref<1x32xf32, #tpu.memory_space<vmem>>, %arg6: memref<1x32xf32, #tpu.memory_space<vmem>>, %arg7: memref<32x128xbf16, #tpu.memory_space<vmem>>, %arg8: memref<1x128xf32, #tpu.memory_space<vmem>>, %arg9: memref<16x128xf32, #tpu.memory_space<vmem>>, %arg10: memref<16x32xbf16, #tpu.memory_space<vmem>>) attributes {dimension_semantics = [#tpu.dimension_semantics<parallel>, #tpu.dimension_semantics<arbitrary>], iteration_bounds = array<i64: 1, 1>, scalar_prefetch = 0 : i64, scratch_operands = 1 : i64, tpu.core_type = #tpu.core_type<tc>, window_params = [{transform_indices = @transform_0, window_bounds = array<i64: 16, 32>}, {pipeline_mode = #tpu.pipeline_mode<synchronous>, transform_indices = @transform_1, window_bounds = array<i64: 32, 32>}, {pipeline_mode = #tpu.pipeline_mode<synchronous>, transform_indices = @transform_2, window_bounds = array<i64: 1, 32>}, {pipeline_mode = #tpu.pipeline_mode<synchronous>, transform_indices = @transform_3, window_bounds = array<i64: 1, 32>}, {pipeline_mode = #tpu.pipeline_mode<synchronous>, transform_indices = @transform_4, window_bounds = array<i64: 1, 32>}, {transform_indices = @transform_5, window_bounds = array<i64: 32, 128>}, {transform_indices = @transform_6, window_bounds = array<i64: 1, 128>}, {transform_indices = @transform_7, window_bounds = array<i64: 16, 128>}]} {
    %c0_i32 = arith.constant 0 : i32
    %0 = arith.cmpi eq, %arg1, %c0_i32 : i32
    %1 = arith.extui %0 : i1 to i32
    %c0_i32_0 = arith.constant 0 : i32
    %2 = arith.cmpi ne, %1, %c0_i32_0 : i32
    scf.if %2 {
      %c0_8 = arith.constant 0 : index
      %c0_9 = arith.constant 0 : index
      %10 = vector.load %arg2[%c0_8, %c0_9] : memref<16x32xbf16, #tpu.memory_space<vmem>>, vector<16x32xbf16>
      %c0_10 = arith.constant 0 : index
      %c0_11 = arith.constant 0 : index
      %11 = vector.load %arg3[%c0_10, %c0_11] : memref<32x32xbf16, #tpu.memory_space<vmem>>, vector<32x32xbf16>
      %cst_12 = arith.constant dense<0.000000e+00> : vector<16x32xf32>
      %12 = tpu.matmul %10, %11, %cst_12 {dimension_numbers = #tpu.dot_dimension_numbers<[1], [0], [0], [1], [0, 0, 1, 1], [], []>} : vector<16x32xbf16>, vector<32x32xbf16>, vector<16x32xf32> -> vector<16x32xf32>
      %c0_13 = arith.constant 0 : index
      %c0_14 = arith.constant 0 : index
      %13 = vector.load %arg4[%c0_13, %c0_14] : memref<1x32xf32, #tpu.memory_space<vmem>>, vector<1x32xf32>
      %14 = vector.broadcast %13 : vector<1x32xf32> to vector<16x32xf32>
      %15 = arith.addf %12, %14 : vector<16x32xf32>
      %cst_15 = arith.constant 5.000000e-01 : f32
      %16 = vector.broadcast %cst_15 : f32 to vector<16x32xf32>
      %17 = arith.mulf %15, %16 : vector<16x32xf32>
      %cst_16 = arith.constant 0.707106769 : f32
      %18 = vector.broadcast %cst_16 : f32 to vector<16x32xf32>
      %19 = arith.mulf %15, %18 : vector<16x32xf32>
      %20 = math.erf %19 : vector<16x32xf32>
      %cst_17 = arith.constant 1.000000e+00 : f32
      %21 = vector.broadcast %cst_17 : f32 to vector<16x32xf32>
      %22 = arith.addf %21, %20 : vector<16x32xf32>
      %23 = arith.mulf %17, %22 : vector<16x32xf32>
      %cst_18 = arith.constant dense<0.000000e+00> : vector<16xf32>
      %24 = vector.multi_reduction <add>, %23, %cst_18 [1] : vector<16x32xf32> to vector<16xf32>
      %25 = vector.shape_cast %24 : vector<16xf32> to vector<16x1xf32>
      %cst_19 = arith.constant 3.200000e+01 : f32
      %26 = vector.broadcast %cst_19 : f32 to vector<16x1xf32>
      %27 = arith.divf %25, %26 : vector<16x1xf32>
      %28 = vector.broadcast %27 : vector<16x1xf32> to vector<16x32xf32>
      %29 = arith.subf %23, %28 : vector<16x32xf32>
      %30 = arith.mulf %29, %29 : vector<16x32xf32>
      %cst_20 = arith.constant dense<0.000000e+00> : vector<16xf32>
      %31 = vector.multi_reduction <add>, %30, %cst_20 [1] : vector<16x32xf32> to vector<16xf32>
      %32 = vector.shape_cast %31 : vector<16xf32> to vector<16x1xf32>
      %cst_21 = arith.constant 3.200000e+01 : f32
      %33 = vector.broadcast %cst_21 : f32 to vector<16x1xf32>
      %34 = arith.divf %32, %33 : vector<16x1xf32>
      %35 = vector.broadcast %27 : vector<16x1xf32> to vector<16x32xf32>
      %36 = arith.subf %23, %35 : vector<16x32xf32>
      %cst_22 = arith.constant 9.99999996E-13 : f32
      %37 = vector.broadcast %cst_22 : f32 to vector<16x1xf32>
      %38 = arith.addf %34, %37 : vector<16x1xf32>
      %39 = math.rsqrt %38 : vector<16x1xf32>
      %40 = vector.broadcast %39 : vector<16x1xf32> to vector<16x32xf32>
      %41 = arith.mulf %36, %40 : vector<16x32xf32>
      %c0_23 = arith.constant 0 : index
      %c0_24 = arith.constant 0 : index
      %42 = vector.load %arg5[%c0_23, %c0_24] : memref<1x32xf32, #tpu.memory_space<vmem>>, vector<1x32xf32>
      %43 = vector.broadcast %42 : vector<1x32xf32> to vector<16x32xf32>
      %44 = arith.mulf %41, %43 : vector<16x32xf32>
      %c0_25 = arith.constant 0 : index
      %c0_26 = arith.constant 0 : index
      %45 = vector.load %arg6[%c0_25, %c0_26] : memref<1x32xf32, #tpu.memory_space<vmem>>, vector<1x32xf32>
      %46 = vector.broadcast %45 : vector<1x32xf32> to vector<16x32xf32>
      %47 = arith.addf %44, %46 : vector<16x32xf32>
      %48 = arith.truncf %47 : vector<16x32xf32> to vector<16x32xbf16>
      %c0_27 = arith.constant 0 : index
      %c0_28 = arith.constant 0 : index
      %49 = vector.load %arg10[%c0_27, %c0_28] : memref<16x32xbf16, #tpu.memory_space<vmem>>, vector<16x32xbf16>
      tpu.vector_store %arg10[%c0_27, %c0_28], %48 {strides = array<i32>} : memref<16x32xbf16, #tpu.memory_space<vmem>>, vector<16x32xbf16>,
    } else {
    }
    %c0 = arith.constant 0 : index
    %c0_1 = arith.constant 0 : index
    %3 = vector.load %arg7[%c0, %c0_1] : memref<32x128xbf16, #tpu.memory_space<vmem>>, vector<32x128xbf16>
    %c0_2 = arith.constant 0 : index
    %c0_3 = arith.constant 0 : index
    %4 = vector.load %arg10[%c0_2, %c0_3] : memref<16x32xbf16, #tpu.memory_space<vmem>>, vector<16x32xbf16>
    %cst = arith.constant dense<0.000000e+00> : vector<16x128xf32>
    %5 = tpu.matmul %4, %3, %cst {dimension_numbers = #tpu.dot_dimension_numbers<[1], [0], [0], [1], [0, 0, 1, 1], [], []>} : vector<16x32xbf16>, vector<32x128xbf16>, vector<16x128xf32> -> vector<16x128xf32>
    %c0_4 = arith.constant 0 : index
    %c0_5 = arith.constant 0 : index
    %6 = vector.load %arg8[%c0_4, %c0_5] : memref<1x128xf32, #tpu.memory_space<vmem>>, vector<1x128xf32>
    %7 = vector.broadcast %6 : vector<1x128xf32> to vector<16x128xf32>
    %8 = arith.addf %5, %7 : vector<16x128xf32>
    %c0_6 = arith.constant 0 : index
    %c0_7 = arith.constant 0 : index
    %9 = vector.load %arg9[%c0_6, %c0_7] : memref<16x128xf32, #tpu.memory_space<vmem>>, vector<16x128xf32>
    tpu.vector_store %arg9[%c0_6, %c0_7], %8 {strides = array<i32>} : memref<16x128xf32, #tpu.memory_space<vmem>>, vector<16x128xf32>,
    return
  }
  func.func @transform_0(%arg0: i32, %arg1: i32) -> (i32, i32) {
    %c0_i32 = arith.constant 0 : i32
    %c0_i32_0 = arith.constant 0 : i32
    return %arg0, %c0_i32 : i32, i32
  }
  func.func @transform_1(%arg0: i32, %arg1: i32) -> (i32, i32) {
    %c0_i32 = arith.constant 0 : i32
    %c0_i32_0 = arith.constant 0 : i32
    %c0_i32_1 = arith.constant 0 : i32
    return %c0_i32, %c0_i32_0 : i32, i32
  }
  func.func @transform_2(%arg0: i32, %arg1: i32) -> (i32, i32) {
    %c0_i32 = arith.constant 0 : i32
    %c0_i32_0 = arith.constant 0 : i32
    %c0_i32_1 = arith.constant 0 : i32
    return %c0_i32, %c0_i32_0 : i32, i32
  }
  func.func @transform_3(%arg0: i32, %arg1: i32) -> (i32, i32) {
    %c0_i32 = arith.constant 0 : i32
    %c0_i32_0 = arith.constant 0 : i32
    %c0_i32_1 = arith.constant 0 : i32
    return %c0_i32, %c0_i32_0 : i32, i32
  }
  func.func @transform_4(%arg0: i32, %arg1: i32) -> (i32, i32) {
    %c0_i32 = arith.constant 0 : i32
    %c0_i32_0 = arith.constant 0 : i32
    %c0_i32_1 = arith.constant 0 : i32
    return %c0_i32, %c0_i32_0 : i32, i32
  }
  func.func @transform_5(%arg0: i32, %arg1: i32) -> (i32, i32) {
    %c0_i32 = arith.constant 0 : i32
    %c0_i32_0 = arith.constant 0 : i32
    return %c0_i32, %arg1 : i32, i32
  }
  func.func @transform_6(%arg0: i32, %arg1: i32) -> (i32, i32) {
    %c0_i32 = arith.constant 0 : i32
    %c0_i32_0 = arith.constant 0 : i32
    return %c0_i32, %arg1 : i32, i32
  }
  func.func @transform_7(%arg0: i32, %arg1: i32) -> (i32, i32) {
    %c0_i32 = arith.constant 0 : i32
    return %arg0, %arg1 : i32, i32
  }
}

</mosaic_0001>

<llo_original>
// kernel: tpu_custom_call.1
$region0: #{tpu_custom_call.1}
  #allocation0 [shape = 'u32[]', space=smem, size = 0x4, offset = 0x4, fixed_abs, tag = 'smem constant byte address 0x4 - core index']
  #allocation1 [shape = 'u32[144,128]{1,0:T(1,128)}', space=vmem, size = 0x12000, scoped, tag = 'internal scratch']
  #allocation2 [shape = 'bf16[16,32]{1,0:T(16,128)(2,1)}', space=vmem, size = 0x1000, scoped, tag = 'scratch operand']
  %s0 = inlined_call_operand.hbm [shape: bf16[16,32], index: 0, kind: input, shape index: {}]
  %s1 = inlined_call_operand.hbm [shape: bf16[32,32], index: 1, kind: input, shape index: {}]
  %s2 = inlined_call_operand.vmem [shape: f32[1,32], index: 2, kind: input, shape index: {}]
  %s3 = inlined_call_operand.vmem [shape: f32[1,32], index: 3, kind: input, shape index: {}]
  %s4 = inlined_call_operand.hbm [shape: f32[1,32], index: 4, kind: input, shape index: {}]
  %s5 = inlined_call_operand.vmem [shape: bf16[32,128], index: 5, kind: input, shape index: {}]
  %s6 = inlined_call_operand.vmem [shape: f32[1,128], index: 6, kind: input, shape index: {}]
  %s7 = inlined_call_operand.hbm [shape: f32[16,128], index: 7, kind: output, shape index: {}]
  %s8 = sld [smem:[#allocation0]]
  $region54: #{tpu_custom_call.1} parent=0
    _
  %s10 = ssub.s32 1, %s8
  %s11 = scalar_select 0, %s10, %s8
  $region1: #{tpu_custom_call.1} parent=0
    #allocation3 [shape = 'u8[4096]{0}', space=vmem, size = 0x1000, scoped, tag = 'input window, operand 0, single buffered']
    #allocation4 [shape = 's32[1]{0}', space=sflag, size = 0x4, scoped, tag = 'scoped memory for tpu_custom_call.1']
    #allocation5 [shape = 's32[1]{0}', space=sflag, size = 0x4, scoped, tag = 'scoped memory for tpu_custom_call.1']
    #allocation6 [shape = 'u8[8192]{0}', space=vmem, size = 0x2000, scoped, tag = 'input window, operand 1, single buffered']
    #allocation7 [shape = 's32[1]{0}', space=sflag, size = 0x4, scoped, tag = 'scoped memory for tpu_custom_call.1']
    #allocation8 [shape = 'u8[512]{0}', space=vmem, size = 0x400, scoped, tag = 'input window, operand 4, single buffered']
    #allocation9 [shape = 'u8[8192]{0}', space=vmem, size = 0x2000, scoped, tag = 'output window, operand 0, single buffered']
    %12 = vsyncpa [#allocation4], 0
    %13 = vsyncpa [#allocation7], 0
    %14 = vsyncpa [#allocation5], 0
    // Predicated region
    $region2: #{tpu_custom_call.1} parent=1 // pred_check
      _
    $region3: #{tpu_custom_call.1} parent=1 // pred_check_branch
      %16 = sbr.rel (0) target = $region5
    $region4: #{tpu_custom_call.1} parent=1 // pred_region
      %s18 = ssub.s32 128, 128
      %19 = vsyncadd [#allocation4], %s18
      %s20 = sshll.u32 [#allocation3], 4
      %s21 = int_to_ptr.vmem [resolvable:$true] %s20
      %26 = dma.hbm_to_vmem [thread:$0]  %s0, 128, %s21, [#allocation4], 64, 64, 4
    $region5: #{tpu_custom_call.1} parent=1 // pred_fallthru
      _
    // Predicated region
    $region6: #{tpu_custom_call.1} parent=1 // pred_check
      _
    $region7: #{tpu_custom_call.1} parent=1 // pred_check_branch
      %28 = sbr.rel (0) target = $region9
    $region8: #{tpu_custom_call.1} parent=1 // pred_region
      %s30 = ssub.s32 256, 256
      %31 = vsyncadd [#allocation7], %s30
      %s32 = sshll.u32 [#allocation6], 4
      %s33 = int_to_ptr.vmem [resolvable:$true] %s32
      %38 = dma.hbm_to_vmem [thread:$0]  %s1, 256, %s33, [#allocation7], 64, 64, 4
    $region9: #{tpu_custom_call.1} parent=1 // pred_fallthru
      _
    // Predicated region
    $region10: #{tpu_custom_call.1} parent=1 // pred_check
      _
    $region11: #{tpu_custom_call.1} parent=1 // pred_check_branch
      %40 = sbr.rel (0) target = $region13
    $region12: #{tpu_custom_call.1} parent=1 // pred_region
      _
    $region13: #{tpu_custom_call.1} parent=1 // pred_fallthru
      _
    // Predicated region
    $region14: #{tpu_custom_call.1} parent=1 // pred_check
      _
    $region15: #{tpu_custom_call.1} parent=1 // pred_check_branch
      %42 = sbr.rel (0) target = $region17
    $region16: #{tpu_custom_call.1} parent=1 // pred_region
      _
    $region17: #{tpu_custom_call.1} parent=1 // pred_fallthru
      _
    // Predicated region
    $region18: #{tpu_custom_call.1} parent=1 // pred_check
      _
    $region19: #{tpu_custom_call.1} parent=1 // pred_check_branch
      %44 = sbr.rel (0) target = $region21
    $region20: #{tpu_custom_call.1} parent=1 // pred_region
      %s46 = ssub.s32 16, 16
      %47 = vsyncadd [#allocation7], %s46
      %s49 = sshll.u32 [#allocation8], 4
      %s50 = int_to_ptr.vmem [resolvable:$true] %s49
      %52 = dma.hbm_to_vmem [thread:$0]  %s4, 16, %s50, [#allocation7]
    $region21: #{tpu_custom_call.1} parent=1 // pred_fallthru
      _
    // Predicated region
    $region22: #{tpu_custom_call.1} parent=1 // pred_check
      _
    $region23: #{tpu_custom_call.1} parent=1 // pred_check_branch
      %54 = sbr.rel (0) target = $region25
    $region24: #{tpu_custom_call.1} parent=1 // pred_region
      _
    $region25: #{tpu_custom_call.1} parent=1 // pred_fallthru
      _
    // Predicated region
    $region26: #{tpu_custom_call.1} parent=1 // pred_check
      _
    $region27: #{tpu_custom_call.1} parent=1 // pred_check_branch
      %56 = sbr.rel (0) target = $region29
    $region28: #{tpu_custom_call.1} parent=1 // pred_region
      _
    $region29: #{tpu_custom_call.1} parent=1 // pred_fallthru
      _
    // Predicated region
    $region30: #{tpu_custom_call.1} parent=1 // pred_check
      _
    $region31: #{tpu_custom_call.1} parent=1 // pred_check_branch
      %58 = sbr.rel (0) target = $region33
    $region32: #{tpu_custom_call.1} parent=1 // pred_region
      %59 = dma.done [#allocation4], 128
    $region33: #{tpu_custom_call.1} parent=1 // pred_fallthru
      _
    // Predicated region
    $region34: #{tpu_custom_call.1} parent=1 // pred_check
      _
    $region35: #{tpu_custom_call.1} parent=1 // pred_check_branch
      %61 = sbr.rel (0) target = $region37
    $region36: #{tpu_custom_call.1} parent=1 // pred_region
      %62 = dma.done [#allocation7], 256
    $region37: #{tpu_custom_call.1} parent=1 // pred_fallthru
      _
    // Predicated region
    $region38: #{tpu_custom_call.1} parent=1 // pred_check
      _
    $region39: #{tpu_custom_call.1} parent=1 // pred_check_branch
      %64 = sbr.rel (0) target = $region41
    $region40: #{tpu_custom_call.1} parent=1 // pred_region
      %65 = dma.done [#allocation7], 16
    $region41: #{tpu_custom_call.1} parent=1 // pred_fallthru
      _
    %p67 = scmp.eq.s32.totalorder 0, 0
    // Predicated region
    $region42: #{tpu_custom_call.1} parent=1 // pred_check
      %p68 = pneg %p67
    $region43: #{tpu_custom_call.1} parent=1 // pred_check_branch
      %70 = sbr.rel (%p68) target = $region45
    $region44: #{tpu_custom_call.1} parent=1 // pred_region
      %v71 = vld [vmem:[#allocation3] sm:$0xf]
      %v72 = vld [vmem:[#allocation3 + $0x4] sm:$0xf]
      %v73 = vld [vmem:[#allocation6] sm:$0xf]
      %v74 = vld [vmem:[#allocation6 + $0x4] sm:$0xf]
      %v75 = vld [vmem:[#allocation6 + $0x8] sm:$0xf]
      %v76 = vld [vmem:[#allocation6 + $0xc] sm:$0xf]
      %v77 = vld [vmem:[%s2] sm:$0x1]
      %v79 = vlaneseq
      %v80 = vshrl.u32 %v79, 7
      %v81 = vsub.s32 0, %v80
      %v82 = vrot.slane %v77, %v81
      %v86 = vunpack.c.l.b16 %v71
      %v87 = vunpack.c.l.b16 %v72
      %v88 = vpack.c.b16 %v87, %v86
      %v93 = vunpack.c.l.b16 %v73
      %v94 = vunpack.c.l.b16 %v74
      %v95 = vunpack.c.l.b16 %v75
      %v96 = vunpack.c.l.b16 %v76
      %v97 = vpack.c.b16 %v94, %v93
      %v98 = vpack.c.b16 %v96, %v95
      %vm101 = vcmask 261120
      %v103 = vsel %vm101, %v88, 0
      %105 = vmatprep.subr.bf16.mxu0 0
      %106 = vmatpush1.bf16.msra.mxu0 %v97
      %107 = vmatprep.subr.bf16.mxu0 0
      %108 = vmatpush1.bf16.msra.mxu0 %v98
      %109 = vmatprep.subr.bf16.mxu0 0
      %110 = vmatpush1.bf16.msra.mxu0 0
      %111 = vmatprep.subr.bf16.mxu0 0
      %112 = vmatpush1.bf16.msra.mxu0 0
      %113 = vmatprep.subr.bf16.mxu0 0
      %114 = vmatpush1.bf16.msra.mxu0 0
      %115 = vmatprep.subr.bf16.mxu0 0
      %116 = vmatpush1.bf16.msra.mxu0 0
      %117 = vmatprep.subr.bf16.mxu0 0
      %118 = vmatpush1.bf16.msra.mxu0 0
      %119 = vmatprep.subr.bf16.mxu0 0
      %120 = vmatpush1.bf16.msra.mxu0 0
      %121 = vmatprep.subr.bf16.mxu0 0
      %122 = vmatpush1.bf16.msra.mxu0 0
      %123 = vmatprep.subr.bf16.mxu0 0
      %124 = vmatpush1.bf16.msra.mxu0 0
      %125 = vmatprep.subr.bf16.mxu0 0
      %126 = vmatpush1.bf16.msra.mxu0 0
      %127 = vmatprep.subr.bf16.mxu0 0
      %128 = vmatpush1.bf16.msra.mxu0 0
      %129 = vmatprep.subr.bf16.mxu0 0
      %130 = vmatpush1.bf16.msra.mxu0 0
      %131 = vmatprep.subr.bf16.mxu0 0
      %132 = vmatpush1.bf16.msra.mxu0 0
      %133 = vmatprep.subr.bf16.mxu0 0
      %134 = vmatpush1.bf16.msra.mxu0 0
      %135 = vmatprep.subr.bf16.mxu0 0
      %136 = vmatpush1.bf16.msra.mxu0 0
      %137 = vmatprep.mubr.bf16.mxu0 0
      %138 = vmatmul.mubr.bf16.gmra.mrb[0].mxu0 %v103
      %v139 = vpop.f32.mrb[0].mxu0
      %v140 = vadd.f32 %v82, %v139
      %v141 = vpop.f32.mrb[0].mxu0
      %v142 = vpop.f32.mrb[0].mxu0
      %v143 = vadd.f32 %v82, %v142
      %v144 = vpop.f32.mrb[0].mxu0
      %145 = vdwg.mxu0
      %v146 = vmul.f32 %v140, 0.5
      %v147 = vmul.f32 %v143, 0.5
      %v148 = vmul.f32 %v140, 0.70710677
      %v149 = vmul.f32 %v143, 0.70710677
      %v150 = verf.f32.pop %v148
      %v151 = verf.f32.pop %v149
      %v152 = vadd.f32 %v150, 1.0
      %v153 = vadd.f32 %v151, 1.0
      %v154 = vmul.f32 %v146, %v152
      %v155 = vmul.f32 %v147, %v153
      %v156 = vsel %vm101, %v154, 0.0
      %157 = vadd.xlane.f32.xlu0 %v156
      %v158 = vpop.xlane.xlu0 %157
      %v159 = vsel %vm101, %v155, 0.0
      %160 = vadd.xlane.f32.xlu0 %v159
      %v161 = vpop.xlane.xlu0 %160
      %v162 = vrcp.pop 32.0
      %v163 = vmul.f32 %v158, %v162
      %v164 = vmul.f32 %v161, %v162
      %v165 = vsub.f32 %v154, %v163
      %v166 = vsub.f32 %v155, %v164
      %v167 = vmul.f32 %v165, %v165
      %v168 = vmul.f32 %v166, %v166
      %v169 = vsel %vm101, %v167, 0.0
      %170 = vadd.xlane.f32.xlu0 %v169
      %v171 = vpop.xlane.xlu0 %170
      %v172 = vsel %vm101, %v168, 0.0
      %173 = vadd.xlane.f32.xlu0 %v172
      %v174 = vpop.xlane.xlu0 %173
      %v175 = vmul.f32 %v171, %v162
      %v176 = vmul.f32 %v174, %v162
      %v177 = vadd.f32 %v175, 1e-12
      %v178 = vadd.f32 %v176, 1e-12
      %v179 = vrsqrt.pop %v177
      %v180 = vrsqrt.pop %v178
      %v181 = vmul.f32 %v165, %v179
      %v182 = vmul.f32 %v166, %v180
      %v183 = vld [vmem:[%s3] sm:$0x1]
      %v185 = vlaneseq
      %v186 = vshrl.u32 %v185, 7
      %v187 = vsub.s32 0, %v186
      %v188 = vrot.slane %v183, %v187
      %v190 = vmul.f32 %v181, %v188
      %v191 = vmul.f32 %v182, %v188
      %v192 = vld [vmem:[#allocation8] sm:$0x1]
      %v194 = vlaneseq
      %v195 = vshrl.u32 %v194, 7
      %v196 = vsub.s32 0, %v195
      %v197 = vrot.slane %v192, %v196
      %v199 = vadd.f32 %v190, %v197
      %v200 = vadd.f32 %v191, %v197
      %v201 = vpack.c.bf16 %v200, %v199
      %202 = vst.msk [vmem:[#allocation2] sm:$0xff] %vm101, %v201
    $region45: #{tpu_custom_call.1} parent=1 // pred_fallthru
      _
    %s203 = smul.u32 0, 128
    %s204 = sshra.s32 %s203, 7
    %s205 = sand.u32 %s203, 127
    %s206 = smul.addr %s204, 4
    %s207 = scalar_lea.vmem %s5, %s206
    %v208 = vld [vmem:[%s207] sm:$0xf]
    %v209 = vld [vmem:[%s207 + $0x4] sm:$0xf]
    %v210 = vld [vmem:[%s207 + $0x8] sm:$0xf]
    %v211 = vld [vmem:[%s207 + $0xc] sm:$0xf]
    %v212 = vld [vmem:[#allocation2] sm:$0xff]
    %v213 = vld [vmem:[%s6] sm:$0x1]
    %v215 = vlaneseq
    %v216 = vshrl.u32 %v215, 7
    %v217 = vsub.s32 0, %v216
    %v218 = vrot.slane %v213, %v217
    %v224 = vunpack.c.l.b16 %v208
    %v225 = vunpack.c.l.b16 %v209
    %v226 = vunpack.c.l.b16 %v210
    %v227 = vunpack.c.l.b16 %v211
    %v228 = vpack.c.b16 %v225, %v224
    %v229 = vpack.c.b16 %v227, %v226
    %vm232 = vcmask 261120
    %v234 = vsel %vm232, %v212, 0
    %236 = vmatprep.subr.bf16.mxu0 0
    %237 = vmatpush1.bf16.msra.mxu0 %v228
    %238 = vmatprep.subr.bf16.mxu0 0
    %239 = vmatpush1.bf16.msra.mxu0 %v229
    %240 = vmatprep.subr.bf16.mxu0 0
    %241 = vmatpush1.bf16.msra.mxu0 0
    %242 = vmatprep.subr.bf16.mxu0 0
    %243 = vmatpush1.bf16.msra.mxu0 0
    %244 = vmatprep.subr.bf16.mxu0 0
    %245 = vmatpush1.bf16.msra.mxu0 0
    %246 = vmatprep.subr.bf16.mxu0 0
    %247 = vmatpush1.bf16.msra.mxu0 0
    %248 = vmatprep.subr.bf16.mxu0 0
    %249 = vmatpush1.bf16.msra.mxu0 0
    %250 = vmatprep.subr.bf16.mxu0 0
    %251 = vmatpush1.bf16.msra.mxu0 0
    %252 = vmatprep.subr.bf16.mxu0 0
    %253 = vmatpush1.bf16.msra.mxu0 0
    %254 = vmatprep.subr.bf16.mxu0 0
    %255 = vmatpush1.bf16.msra.mxu0 0
    %256 = vmatprep.subr.bf16.mxu0 0
    %257 = vmatpush1.bf16.msra.mxu0 0
    %258 = vmatprep.subr.bf16.mxu0 0
    %259 = vmatpush1.bf16.msra.mxu0 0
    %260 = vmatprep.subr.bf16.mxu0 0
    %261 = vmatpush1.bf16.msra.mxu0 0
    %262 = vmatprep.subr.bf16.mxu0 0
    %263 = vmatpush1.bf16.msra.mxu0 0
    %264 = vmatprep.subr.bf16.mxu0 0
    %265 = vmatpush1.bf16.msra.mxu0 0
    %266 = vmatprep.subr.bf16.mxu0 0
    %267 = vmatpush1.bf16.msra.mxu0 0
    %268 = vmatprep.mubr.bf16.mxu0 0
    %269 = vmatmul.mubr.bf16.gmra.mrb[0].mxu0 %v234
    %v270 = vpop.f32.mrb[0].mxu0
    %v271 = vadd.f32 %v218, %v270
    %v272 = vpop.f32.mrb[0].mxu0
    %v273 = vpop.f32.mrb[0].mxu0
    %v274 = vadd.f32 %v218, %v273
    %v275 = vpop.f32.mrb[0].mxu0
    %276 = vdwg.mxu0
    %277 = vst [vmem:[#allocation9] sm:$0xff] %v271
    %278 = vst [vmem:[#allocation9 + $0x8] sm:$0xff] %v274
    // Predicated region
    $region46: #{tpu_custom_call.1} parent=1 // pred_check
      _
    $region47: #{tpu_custom_call.1} parent=1 // pred_check_branch
      %280 = sbr.rel (0) target = $region49
    $region48: #{tpu_custom_call.1} parent=1 // pred_region
      %s282 = ssub.s32 256, 256
      %283 = vsyncadd [#allocation5], %s282
      %s284 = sshll.u32 [#allocation9], 4
      %s285 = int_to_ptr.vmem [resolvable:$true] %s284
      %290 = dma.vmem_to_hbm [thread:$0]  %s285, 256, %s7, [#allocation5], 128, 128, 8
    $region49: #{tpu_custom_call.1} parent=1 // pred_fallthru
      _
    // Predicated region
    $region50: #{tpu_custom_call.1} parent=1 // pred_check
      _
    $region51: #{tpu_custom_call.1} parent=1 // pred_check_branch
      %292 = sbr.rel (0) target = $region53
    $region52: #{tpu_custom_call.1} parent=1 // pred_region
      %293 = dma.done [#allocation5], 256
    $region53: #{tpu_custom_call.1} parent=1 // pred_fallthru
      _
    %294 = vsyncpa [#allocation4], 1
    %295 = vsyncpa [#allocation7], 1
    %296 = vsyncpa [#allocation5], 1

// kernel: tpu_custom_call.1
$region0: #{tpu_custom_call.1}
  #allocation0 [shape = 'u32[]', space=smem, size = 0x4, offset = 0x4, fixed_abs, tag = 'smem constant byte address 0x4 - core index']
  #allocation1 [shape = 'u32[144,128]{1,0:T(1,128)}', space=vmem, size = 0x12000, scoped, tag = 'internal scratch']
  #allocation2 [shape = 'bf16[16,32]{1,0:T(16,128)(2,1)}', space=vmem, size = 0x1000, scoped, tag = 'scratch operand']
  %s0 = inlined_call_operand.hbm [shape: bf16[16,32], index: 0, kind: input, shape index: {}]
  %s1 = inlined_call_operand.hbm [shape: bf16[32,32], index: 1, kind: input, shape index: {}]
  %s2 = inlined_call_operand.vmem [shape: f32[1,32], index: 2, kind: input, shape index: {}]
  %s3 = inlined_call_operand.vmem [shape: f32[1,32], index: 3, kind: input, shape index: {}]
  %s4 = inlined_call_operand.hbm [shape: f32[1,32], index: 4, kind: input, shape index: {}]
  %s5 = inlined_call_operand.vmem [shape: bf16[32,128], index: 5, kind: input, shape index: {}]
  %s6 = inlined_call_operand.vmem [shape: f32[1,128], index: 6, kind: input, shape index: {}]
  %s7 = inlined_call_operand.hbm [shape: f32[16,128], index: 7, kind: output, shape index: {}]
  %s8 = sld [smem:[#allocation0]]
  $region54: #{tpu_custom_call.1} parent=0
    _
  %s10 = ssub.s32 1, %s8
  %s11 = scalar_select 0, %s10, %s8
  $region1: #{tpu_custom_call.1} parent=0
    #allocation3 [shape = 'u8[4096]{0}', space=vmem, size = 0x1000, scoped, tag = 'input window, operand 0, single buffered']
    #allocation4 [shape = 's32[1]{0}', space=sflag, size = 0x4, scoped, tag = 'scoped memory for tpu_custom_call.1']
    #allocation5 [shape = 's32[1]{0}', space=sflag, size = 0x4, scoped, tag = 'scoped memory for tpu_custom_call.1']
    #allocation6 [shape = 'u8[8192]{0}', space=vmem, size = 0x2000, scoped, tag = 'input window, operand 1, single buffered']
    #allocation7 [shape = 's32[1]{0}', space=sflag, size = 0x4, scoped, tag = 'scoped memory for tpu_custom_call.1']
    #allocation8 [shape = 'u8[512]{0}', space=vmem, size = 0x400, scoped, tag = 'input window, operand 4, single buffered']
    #allocation9 [shape = 'u8[8192]{0}', space=vmem, size = 0x2000, scoped, tag = 'output window, operand 0, single buffered']
    %12 = vsyncpa [#allocation4], 0
    %13 = vsyncpa [#allocation7], 0
    %14 = vsyncpa [#allocation5], 0
    // Predicated region
    $region2: #{tpu_custom_call.1} parent=1 // pred_check
      _
    $region3: #{tpu_custom_call.1} parent=1 // pred_check_branch
      %16 = sbr.rel (0) target = $region5
    $region4: #{tpu_custom_call.1} parent=1 // pred_region
      %s18 = ssub.s32 128, 128
      %19 = vsyncadd [#allocation4], %s18
      %s20 = sshll.u32 [#allocation3], 4
      %s21 = int_to_ptr.vmem [resolvable:$true] %s20
      %26 = dma.hbm_to_vmem [thread:$0]  %s0, 128, %s21, [#allocation4], 64, 64, 4
    $region5: #{tpu_custom_call.1} parent=1 // pred_fallthru
      _
    // Predicated region
    $region6: #{tpu_custom_call.1} parent=1 // pred_check
      _
    $region7: #{tpu_custom_call.1} parent=1 // pred_check_branch
      %28 = sbr.rel (0) target = $region9
    $region8: #{tpu_custom_call.1} parent=1 // pred_region
      %s30 = ssub.s32 256, 256
      %31 = vsyncadd [#allocation7], %s30
      %s32 = sshll.u32 [#allocation6], 4
      %s33 = int_to_ptr.vmem [resolvable:$true] %s32
      %38 = dma.hbm_to_vmem [thread:$0]  %s1, 256, %s33, [#allocation7], 64, 64, 4
    $region9: #{tpu_custom_call.1} parent=1 // pred_fallthru
      _
    // Predicated region
    $region10: #{tpu_custom_call.1} parent=1 // pred_check
      _
    $region11: #{tpu_custom_call.1} parent=1 // pred_check_branch
      %40 = sbr.rel (0) target = $region13
    $region12: #{tpu_custom_call.1} parent=1 // pred_region
      _
    $region13: #{tpu_custom_call.1} parent=1 // pred_fallthru
      _
    // Predicated region
    $region14: #{tpu_custom_call.1} parent=1 // pred_check
      _
    $region15: #{tpu_custom_call.1} parent=1 // pred_check_branch
      %42 = sbr.rel (0) target = $region17
    $region16: #{tpu_custom_call.1} parent=1 // pred_region
      _
    $region17: #{tpu_custom_call.1} parent=1 // pred_fallthru
      _
    // Predicated region
    $region18: #{tpu_custom_call.1} parent=1 // pred_check
      _
    $region19: #{tpu_custom_call.1} parent=1 // pred_check_branch
      %44 = sbr.rel (0) target = $region21
    $region20: #{tpu_custom_call.1} parent=1 // pred_region
      %s46 = ssub.s32 16, 16
      %47 = vsyncadd [#allocation7], %s46
      %s49 = sshll.u32 [#allocation8], 4
      %s50 = int_to_ptr.vmem [resolvable:$true] %s49
      %52 = dma.hbm_to_vmem [thread:$0]  %s4, 16, %s50, [#allocation7]
    $region21: #{tpu_custom_call.1} parent=1 // pred_fallthru
      _
    // Predicated region
    $region22: #{tpu_custom_call.1} parent=1 // pred_check
      _
    $region23: #{tpu_custom_call.1} parent=1 // pred_check_branch
      %54 = sbr.rel (0) target = $region25
    $region24: #{tpu_custom_call.1} parent=1 // pred_region
      _
    $region25: #{tpu_custom_call.1} parent=1 // pred_fallthru
      _
    // Predicated region
    $region26: #{tpu_custom_call.1} parent=1 // pred_check
      _
    $region27: #{tpu_custom_call.1} parent=1 // pred_check_branch
      %56 = sbr.rel (0) target = $region29
    $region28: #{tpu_custom_call.1} parent=1 // pred_region
      _
    $region29: #{tpu_custom_call.1} parent=1 // pred_fallthru
      _
    // Predicated region
    $region30: #{tpu_custom_call.1} parent=1 // pred_check
      _
    $region31: #{tpu_custom_call.1} parent=1 // pred_check_branch
      %58 = sbr.rel (0) target = $region33
    $region32: #{tpu_custom_call.1} parent=1 // pred_region
      %59 = dma.done [#allocation4], 128
    $region33: #{tpu_custom_call.1} parent=1 // pred_fallthru
      _
    // Predicated region
    $region34: #{tpu_custom_call.1} parent=1 // pred_check
      _
    $region35: #{tpu_custom_call.1} parent=1 // pred_check_branch
      %61 = sbr.rel (0) target = $region37
    $region36: #{tpu_custom_call.1} parent=1 // pred_region
      %62 = dma.done [#allocation7], 256
    $region37: #{tpu_custom_call.1} parent=1 // pred_fallthru
      _
    // Predicated region
    $region38: #{tpu_custom_call.1} parent=1 // pred_check
      _
    $region39: #{tpu_custom_call.1} parent=1 // pred_check_branch
      %64 = sbr.rel (0) target = $region41
    $region40: #{tpu_custom_call.1} parent=1 // pred_region
      %65 = dma.done [#allocation7], 16
    $region41: #{tpu_custom_call.1} parent=1 // pred_fallthru
      _
    %p67 = scmp.eq.s32.totalorder 0, 0
    // Predicated region
    $region42: #{tpu_custom_call.1} parent=1 // pred_check
      %p68 = pneg %p67
    $region43: #{tpu_custom_call.1} parent=1 // pred_check_branch
      %70 = sbr.rel (%p68) target = $region45
    $region44: #{tpu_custom_call.1} parent=1 // pred_region
      %v71 = vld [vmem:[#allocation3] sm:$0xf]
      %v72 = vld [vmem:[#allocation3 + $0x4] sm:$0xf]
      %v73 = vld [vmem:[#allocation6] sm:$0xf]
      %v74 = vld [vmem:[#allocation6 + $0x4] sm:$0xf]
      %v75 = vld [vmem:[#allocation6 + $0x8] sm:$0xf]
      %v76 = vld [vmem:[#allocation6 + $0xc] sm:$0xf]
      %v77 = vld [vmem:[%s2] sm:$0x1]
      %v79 = vlaneseq
      %v80 = vshrl.u32 %v79, 7
      %v81 = vsub.s32 0, %v80
      %v82 = vrot.slane %v77, %v81
      %v86 = vunpack.c.l.b16 %v71
      %v87 = vunpack.c.l.b16 %v72
      %v88 = vpack.c.b16 %v87, %v86
      %v93 = vunpack.c.l.b16 %v73
      %v94 = vunpack.c.l.b16 %v74
      %v95 = vunpack.c.l.b16 %v75
      %v96 = vunpack.c.l.b16 %v76
      %v97 = vpack.c.b16 %v94, %v93
      %v98 = vpack.c.b16 %v96, %v95
      %vm101 = vcmask 261120
      %v103 = vsel %vm101, %v88, 0
      %105 = vmatprep.subr.bf16.mxu0 0
      %106 = vmatpush1.bf16.msra.mxu0 %v97
      %107 = vmatprep.subr.bf16.mxu0 0
      %108 = vmatpush1.bf16.msra.mxu0 %v98
      %109 = vmatprep.subr.bf16.mxu0 0
      %110 = vmatpush1.bf16.msra.mxu0 0
      %111 = vmatprep.subr.bf16.mxu0 0
      %112 = vmatpush1.bf16.msra.mxu0 0
      %113 = vmatprep.subr.bf16.mxu0 0
      %114 = vmatpush1.bf16.msra.mxu0 0
      %115 = vmatprep.subr.bf16.mxu0 0
      %116 = vmatpush1.bf16.msra.mxu0 0
      %117 = vmatprep.subr.bf16.mxu0 0
      %118 = vmatpush1.bf16.msra.mxu0 0
      %119 = vmatprep.subr.bf16.mxu0 0
      %120 = vmatpush1.bf16.msra.mxu0 0
      %121 = vmatprep.subr.bf16.mxu0 0
      %122 = vmatpush1.bf16.msra.mxu0 0
      %123 = vmatprep.subr.bf16.mxu0 0
      %124 = vmatpush1.bf16.msra.mxu0 0
      %125 = vmatprep.subr.bf16.mxu0 0
      %126 = vmatpush1.bf16.msra.mxu0 0
      %127 = vmatprep.subr.bf16.mxu0 0
      %128 = vmatpush1.bf16.msra.mxu0 0
      %129 = vmatprep.subr.bf16.mxu0 0
      %130 = vmatpush1.bf16.msra.mxu0 0
      %131 = vmatprep.subr.bf16.mxu0 0
      %132 = vmatpush1.bf16.msra.mxu0 0
      %133 = vmatprep.subr.bf16.mxu0 0
      %134 = vmatpush1.bf16.msra.mxu0 0
      %135 = vmatprep.subr.bf16.mxu0 0
      %136 = vmatpush1.bf16.msra.mxu0 0
      %137 = vmatprep.mubr.bf16.mxu0 0
      %138 = vmatmul.mubr.bf16.gmra.mrb[0].mxu0 %v103
      %v139 = vpop.f32.mrb[0].mxu0
      %v140 = vadd.f32 %v82, %v139
      %v141 = vpop.f32.mrb[0].mxu0
      %v142 = vpop.f32.mrb[0].mxu0
      %v143 = vadd.f32 %v82, %v142
      %v144 = vpop.f32.mrb[0].mxu0
      %145 = vdwg.mxu0
      %v146 = vmul.f32 %v140, 0.5
      %v147 = vmul.f32 %v143, 0.5
      %v148 = vmul.f32 %v140, 0.70710677
      %v149 = vmul.f32 %v143, 0.70710677
      %v150 = verf.f32.pop %v148
      %v151 = verf.f32.pop %v149
      %v152 = vadd.f32 %v150, 1.0
      %v153 = vadd.f32 %v151, 1.0
      %v154 = vmul.f32 %v146, %v152
      %v155 = vmul.f32 %v147, %v153
      %v156 = vsel %vm101, %v154, 0.0
      %157 = vadd.xlane.f32.xlu0 %v156
      %v158 = vpop.xlane.xlu0 %157
      %v159 = vsel %vm101, %v155, 0.0
      %160 = vadd.xlane.f32.xlu0 %v159
      %v161 = vpop.xlane.xlu0 %160
      %v162 = vrcp.pop 32.0
      %v163 = vmul.f32 %v158, %v162
      %v164 = vmul.f32 %v161, %v162
      %v165 = vsub.f32 %v154, %v163
      %v166 = vsub.f32 %v155, %v164
      %v167 = vmul.f32 %v165, %v165
      %v168 = vmul.f32 %v166, %v166
      %v169 = vsel %vm101, %v167, 0.0
      %170 = vadd.xlane.f32.xlu0 %v169
      %v171 = vpop.xlane.xlu0 %170
      %v172 = vsel %vm101, %v168, 0.0
      %173 = vadd.xlane.f32.xlu0 %v172
      %v174 = vpop.xlane.xlu0 %173
      %v175 = vmul.f32 %v171, %v162
      %v176 = vmul.f32 %v174, %v162
      %v177 = vadd.f32 %v175, 1e-12
      %v178 = vadd.f32 %v176, 1e-12
      %v179 = vrsqrt.pop %v177
      %v180 = vrsqrt.pop %v178
      %v181 = vmul.f32 %v165, %v179
      %v182 = vmul.f32 %v166, %v180
      %v183 = vld [vmem:[%s3] sm:$0x1]
      %v185 = vlaneseq
      %v186 = vshrl.u32 %v185, 7
      %v187 = vsub.s32 0, %v186
      %v188 = vrot.slane %v183, %v187
      %v190 = vmul.f32 %v181, %v188
      %v191 = vmul.f32 %v182, %v188
      %v192 = vld [vmem:[#allocation8] sm:$0x1]
      %v194 = vlaneseq
      %v195 = vshrl.u32 %v194, 7
      %v196 = vsub.s32 0, %v195
      %v197 = vrot.slane %v192, %v196
      %v199 = vadd.f32 %v190, %v197
      %v200 = vadd.f32 %v191, %v197
      %v201 = vpack.c.bf16 %v200, %v199
      %202 = vst.msk [vmem:[#allocation2] sm:$0xff] %vm101, %v201
    $region45: #{tpu_custom_call.1} parent=1 // pred_fallthru
      _
    %v203 = vld [vmem:[%s5] sm:$0xf]
    %v204 = vld [vmem:[%s5 + $0x4] sm:$0xf]
    %v205 = vld [vmem:[%s5 + $0x8] sm:$0xf]
    %v206 = vld [vmem:[%s5 + $0xc] sm:$0xf]
    %v207 = vld [vmem:[#allocation2] sm:$0xff]
    %v208 = vld [vmem:[%s6] sm:$0x1]
    %v210 = vlaneseq
    %v211 = vshrl.u32 %v210, 7
    %v212 = vsub.s32 0, %v211
    %v213 = vrot.slane %v208, %v212
    %v219 = vunpack.c.l.b16 %v203
    %v220 = vunpack.c.l.b16 %v204
    %v221 = vunpack.c.l.b16 %v205
    %v222 = vunpack.c.l.b16 %v206
    %v223 = vpack.c.b16 %v220, %v219
    %v224 = vpack.c.b16 %v222, %v221
    %vm227 = vcmask 261120
    %v229 = vsel %vm227, %v207, 0
    %231 = vmatprep.subr.bf16.mxu0 0
    %232 = vmatpush1.bf16.msra.mxu0 %v223
    %233 = vmatprep.subr.bf16.mxu0 0
    %234 = vmatpush1.bf16.msra.mxu0 %v224
    %235 = vmatprep.subr.bf16.mxu0 0
    %236 = vmatpush1.bf16.msra.mxu0 0
    %237 = vmatprep.subr.bf16.mxu0 0
    %238 = vmatpush1.bf16.msra.mxu0 0
    %239 = vmatprep.subr.bf16.mxu0 0
    %240 = vmatpush1.bf16.msra.mxu0 0
    %241 = vmatprep.subr.bf16.mxu0 0
    %242 = vmatpush1.bf16.msra.mxu0 0
    %243 = vmatprep.subr.bf16.mxu0 0
    %244 = vmatpush1.bf16.msra.mxu0 0
    %245 = vmatprep.subr.bf16.mxu0 0
    %246 = vmatpush1.bf16.msra.mxu0 0
    %247 = vmatprep.subr.bf16.mxu0 0
    %248 = vmatpush1.bf16.msra.mxu0 0
    %249 = vmatprep.subr.bf16.mxu0 0
    %250 = vmatpush1.bf16.msra.mxu0 0
    %251 = vmatprep.subr.bf16.mxu0 0
    %252 = vmatpush1.bf16.msra.mxu0 0
    %253 = vmatprep.subr.bf16.mxu0 0
    %254 = vmatpush1.bf16.msra.mxu0 0
    %255 = vmatprep.subr.bf16.mxu0 0
    %256 = vmatpush1.bf16.msra.mxu0 0
    %257 = vmatprep.subr.bf16.mxu0 0
    %258 = vmatpush1.bf16.msra.mxu0 0
    %259 = vmatprep.subr.bf16.mxu0 0
    %260 = vmatpush1.bf16.msra.mxu0 0
    %261 = vmatprep.subr.bf16.mxu0 0
    %262 = vmatpush1.bf16.msra.mxu0 0
    %263 = vmatprep.mubr.bf16.mxu0 0
    %264 = vmatmul.mubr.bf16.gmra.mrb[0].mxu0 %v229
    %v265 = vpop.f32.mrb[0].mxu0
    %v266 = vadd.f32 %v213, %v265
    %v267 = vpop.f32.mrb[0].mxu0
    %v268 = vpop.f32.mrb[0].mxu0
    %v269 = vadd.f32 %v213, %v268
    %v270 = vpop.f32.mrb[0].mxu0
    %271 = vdwg.mxu0
    %272 = vst [vmem:[#allocation9] sm:$0xff] %v266
    %273 = vst [vmem:[#allocation9 + $0x8] sm:$0xff] %v269
    // Predicated region
    $region46: #{tpu_custom_call.1} parent=1 // pred_check
      _
    $region47: #{tpu_custom_call.1} parent=1 // pred_check_branch
      %275 = sbr.rel (0) target = $region49
    $region48: #{tpu_custom_call.1} parent=1 // pred_region
      %s277 = ssub.s32 256, 256
      %278 = vsyncadd [#allocation5], %s277
      %s279 = sshll.u32 [#allocation9], 4
      %s280 = int_to_ptr.vmem [resolvable:$true] %s279
      %285 = dma.vmem_to_hbm [thread:$0]  %s280, 256, %s7, [#allocation5], 128, 128, 8
    $region49: #{tpu_custom_call.1} parent=1 // pred_fallthru
      _
    // Predicated region
    $region50: #{tpu_custom_call.1} parent=1 // pred_check
      _
    $region51: #{tpu_custom_call.1} parent=1 // pred_check_branch
      %287 = sbr.rel (0) target = $region53
    $region52: #{tpu_custom_call.1} parent=1 // pred_region
      %288 = dma.done [#allocation5], 256
    $region53: #{tpu_custom_call.1} parent=1 // pred_fallthru
      _
    %289 = vsyncpa [#allocation4], 1
    %290 = vsyncpa [#allocation7], 1
    %291 = vsyncpa [#allocation5], 1

</llo_original>
